<compile_context>
chip_gen: v7x
topology: tpu7x:2x2x1
jax: 0.10.0
libtpu: 0.0.40
codegen_flags: <defaults>
</compile_context>

<pallas_src>
import functools

import jax
import jax.numpy as jnp
from jax.experimental import pallas as pl
from jax.experimental.pallas import tpu as pltpu


def _round_up(n, m):
    return ((n + m - 1) // m) * m


def _gumbel_classifier_kernel(x_ref, w_ref, b_ref, u_ref,
                              logits_ref, alphas_ref, *, inv_temp, eps):
    # Linear layer: (tb, D) @ (D, Lp) + (1, Lp) -> (tb, Lp), f32 accumulate.
    y = jnp.dot(x_ref[...], w_ref[...], preferred_element_type=jnp.float32)
    y = y + b_ref[...]

    # Softmax over the (lane-dense, padded) label axis.  Padded columns carry
    # a -1e30 bias so exp() sends them to zero and they don't dilute alphas.
    m = jnp.max(y, axis=-1, keepdims=True)
    e = jnp.exp(y - m)
    denom = jnp.sum(e, axis=-1, keepdims=True)
    alphas_ref[...] = e * pl.reciprocal(denom, approx=True)

    # Gumbel-softmax logits using the log-softmax form directly (avoids the
    # exp -> log round trip of log(softmax(y) + eps); only a (tb,1) log added).
    log_alphas = (y - m) - jnp.log(denom)
    gumbel = -jnp.log(-jnp.log(u_ref[...] + eps) + eps)
    logits_ref[...] = (log_alphas + gumbel) * inv_temp


def gumbel_classifier(x, w, b, unif, *, temperature=0.1, eps=1e-12, tb=512):
    """x: (B, D) f32; w: (L, D) torch-layout Linear weight; b: (L,);
    unif: (B, L) uniform [0,1) noise.  Returns (logits, alphas), both (B, L)."""
    B, D = x.shape
    L = w.shape[0]
    LANE = 128

    # Lane-dense label axis + batch padded to a multiple of the batch tile.
    Lp = _round_up(max(L, 1), LANE)
    tb = min(tb, _round_up(B, 8))
    Bp = _round_up(B, tb)

    w_t = jnp.zeros((D, Lp), jnp.float32).at[:, :L].set(
        jnp.transpose(w).astype(jnp.float32))
    b_row = jnp.full((1, Lp), -1e30, jnp.float32).at[0, :L].set(
        b.astype(jnp.float32))
    x_p = jnp.zeros((Bp, D), jnp.float32).at[:B, :].set(x.astype(jnp.float32))
    u_p = jnp.full((Bp, Lp), 0.5, jnp.float32).at[:B, :L].set(
        unif.astype(jnp.float32))

    kernel = functools.partial(_gumbel_classifier_kernel,
                               inv_temp=float(1.0 / temperature),
                               eps=float(eps))
    grid = (Bp // tb,)

    logits, alphas = pl.pallas_call(
        kernel,
        grid=grid,
        out_shape=(jax.ShapeDtypeStruct((Bp, Lp), jnp.float32),
                   jax.ShapeDtypeStruct((Bp, Lp), jnp.float32)),
        in_specs=[
            pl.BlockSpec((tb, D), lambda i: (i, 0)),   # x tile (streams)
            pl.BlockSpec((D, Lp), lambda i: (0, 0)),   # weight (resident)
            pl.BlockSpec((1, Lp), lambda i: (0, 0)),   # bias   (resident)
            pl.BlockSpec((tb, Lp), lambda i: (i, 0)),  # uniform noise tile
        ],
        out_specs=(
            pl.BlockSpec((tb, Lp), lambda i: (i, 0)),  # logits
            pl.BlockSpec((tb, Lp), lambda i: (i, 0)),  # alphas
        ),
        compiler_params=pltpu.CompilerParams(
            dimension_semantics=("parallel",)),
    )(x_p, w_t, b_row, u_p)

    return logits[:B, :L], alphas[:B, :L]


if __name__ == "__main__":
    # Small synthetic configuration consistent with the module:
    #   insize (hidden) = 32, label_dim = 8, batch = 16 (tiled as 2 x 8 rows).
    B, D, L = 16, 32, 8
    temperature = 0.1
    eps = 1e-12

    key = jax.random.PRNGKey(0)
    kx, kw, kb, ku = jax.random.split(key, 4)

    x = jax.random.normal(kx, (B, D), dtype=jnp.float32)
    # Deterministic init mimicking nn.Linear's uniform(-1/sqrt(D), 1/sqrt(D)).
    bound = 1.0 / float(D) ** 0.5
    w = jax.random.uniform(kw, (L, D), minval=-bound, maxval=bound,
                           dtype=jnp.float32)          # torch layout (L, D)
    b = jax.random.uniform(kb, (L,), minval=-bound, maxval=bound,
                           dtype=jnp.float32)
    unif = jax.random.uniform(ku, (B, L), dtype=jnp.float32)  # torch.rand

    logits, alphas = gumbel_classifier(x, w, b, unif,
                                       temperature=temperature, tb=8)
    jax.block_until_ready((logits, alphas))

    # Pure-JAX reference using identical uniform noise.
    y_ref = x @ w.T + b
    alphas_ref = jax.nn.softmax(y_ref, axis=-1)
    gumbel_ref = -jnp.log(-jnp.log(unif + eps) + eps)
    logits_ref = (jnp.log(alphas_ref + eps) + gumbel_ref) / temperature

    assert logits.shape == (B, L) and alphas.shape == (B, L)
    # approx reciprocal makes alphas accurate to ~bf16-level relative error.
    assert bool(jnp.allclose(jnp.sum(alphas, axis=-1), 1.0, atol=2e-2))
    assert bool(jnp.allclose(alphas, alphas_ref, rtol=1e-2, atol=1e-2))
    assert bool(jnp.allclose(logits, logits_ref, rtol=5e-3, atol=5e-2))
    assert bool(jnp.all(jnp.isfinite(logits)))
    print("KERNEL_OK")
</pallas_src>

<mosaic_0001>
module attributes {stable_mosaic.version = 11 : i64} {
  func.func @_gumbel_classifier_kernel(%arg0: i32, %arg1: memref<8x32xf32, #tpu.memory_space<vmem>>, %arg2: memref<32x128xf32, #tpu.memory_space<vmem>>, %arg3: memref<1x128xf32, #tpu.memory_space<vmem>>, %arg4: memref<8x128xf32, #tpu.memory_space<vmem>>, %arg5: memref<8x128xf32, #tpu.memory_space<vmem>>, %arg6: memref<8x128xf32, #tpu.memory_space<vmem>>) attributes {dimension_semantics = [#tpu.dimension_semantics<parallel>], iteration_bounds = array<i64: 2>, scalar_prefetch = 0 : i64, scratch_operands = 0 : i64, tpu.core_type = #tpu.core_type<tc>, window_params = [{transform_indices = @transform_0, window_bounds = array<i64: 8, 32>}, {pipeline_mode = #tpu.pipeline_mode<synchronous>, transform_indices = @transform_1, window_bounds = array<i64: 32, 128>}, {pipeline_mode = #tpu.pipeline_mode<synchronous>, transform_indices = @transform_2, window_bounds = array<i64: 1, 128>}, {transform_indices = @transform_3, window_bounds = array<i64: 8, 128>}, {transform_indices = @transform_4, window_bounds = array<i64: 8, 128>}, {transform_indices = @transform_5, window_bounds = array<i64: 8, 128>}]} {
    %c0 = arith.constant 0 : index
    %c0_0 = arith.constant 0 : index
    %0 = vector.load %arg1[%c0, %c0_0] : memref<8x32xf32, #tpu.memory_space<vmem>>, vector<8x32xf32>
    %c0_1 = arith.constant 0 : index
    %c0_2 = arith.constant 0 : index
    %1 = vector.load %arg2[%c0_1, %c0_2] : memref<32x128xf32, #tpu.memory_space<vmem>>, vector<32x128xf32>
    %cst = arith.constant dense<0.000000e+00> : vector<8x128xf32>
    %2 = tpu.matmul %0, %1, %cst {dimension_numbers = #tpu.dot_dimension_numbers<[1], [0], [0], [1], [0, 0, 1, 1], [], []>} : vector<8x32xf32>, vector<32x128xf32>, vector<8x128xf32> -> vector<8x128xf32>
    %c0_3 = arith.constant 0 : index
    %c0_4 = arith.constant 0 : index
    %3 = vector.load %arg3[%c0_3, %c0_4] : memref<1x128xf32, #tpu.memory_space<vmem>>, vector<1x128xf32>
    %4 = vector.broadcast %3 : vector<1x128xf32> to vector<8x128xf32>
    %5 = arith.addf %2, %4 : vector<8x128xf32>
    %cst_5 = arith.constant dense<0xFF800000> : vector<8xf32>
    %6 = vector.multi_reduction <maximumf>, %5, %cst_5 [1] : vector<8x128xf32> to vector<8xf32>
    %7 = vector.shape_cast %6 : vector<8xf32> to vector<8x1xf32>
    %8 = vector.broadcast %7 : vector<8x1xf32> to vector<8x128xf32>
    %9 = arith.subf %5, %8 : vector<8x128xf32>
    %10 = math.exp %9 : vector<8x128xf32>
    %cst_6 = arith.constant dense<0.000000e+00> : vector<8xf32>
    %11 = vector.multi_reduction <add>, %10, %cst_6 [1] : vector<8x128xf32> to vector<8xf32>
    %12 = vector.shape_cast %11 : vector<8xf32> to vector<8x1xf32>
    %13 = tpu.reciprocal %12 {approx = true} : vector<8x1xf32> -> vector<8x1xf32>
    %14 = vector.broadcast %13 : vector<8x1xf32> to vector<8x128xf32>
    %15 = arith.mulf %10, %14 : vector<8x128xf32>
    %c0_7 = arith.constant 0 : index
    %c0_8 = arith.constant 0 : index
    %16 = vector.load %arg6[%c0_7, %c0_8] : memref<8x128xf32, #tpu.memory_space<vmem>>, vector<8x128xf32>
    tpu.vector_store %arg6[%c0_7, %c0_8], %15 {strides = array<i32>} : memref<8x128xf32, #tpu.memory_space<vmem>>, vector<8x128xf32>,
    %17 = vector.broadcast %7 : vector<8x1xf32> to vector<8x128xf32>
    %18 = arith.subf %5, %17 : vector<8x128xf32>
    %19 = math.log %12 : vector<8x1xf32>
    %20 = vector.broadcast %19 : vector<8x1xf32> to vector<8x128xf32>
    %21 = arith.subf %18, %20 : vector<8x128xf32>
    %c0_9 = arith.constant 0 : index
    %c0_10 = arith.constant 0 : index
    %22 = vector.load %arg4[%c0_9, %c0_10] : memref<8x128xf32, #tpu.memory_space<vmem>>, vector<8x128xf32>
    %cst_11 = arith.constant 9.99999996E-13 : f32
    %23 = vector.broadcast %cst_11 : f32 to vector<8x128xf32>
    %24 = arith.addf %22, %23 : vector<8x128xf32>
    %25 = math.log %24 : vector<8x128xf32>
    %cst_12 = arith.constant 0.000000e+00 : f32
    %26 = vector.broadcast %cst_12 : f32 to vector<8x128xf32>
    %27 = arith.subf %26, %25 : vector<8x128xf32>
    %cst_13 = arith.constant 9.99999996E-13 : f32
    %28 = vector.broadcast %cst_13 : f32 to vector<8x128xf32>
    %29 = arith.addf %27, %28 : vector<8x128xf32>
    %30 = math.log %29 : vector<8x128xf32>
    %cst_14 = arith.constant 0.000000e+00 : f32
    %31 = vector.broadcast %cst_14 : f32 to vector<8x128xf32>
    %32 = arith.subf %31, %30 : vector<8x128xf32>
    %33 = arith.addf %21, %32 : vector<8x128xf32>
    %cst_15 = arith.constant 1.000000e+01 : f32
    %34 = vector.broadcast %cst_15 : f32 to vector<8x128xf32>
    %35 = arith.mulf %33, %34 : vector<8x128xf32>
    %c0_16 = arith.constant 0 : index
    %c0_17 = arith.constant 0 : index
    %36 = vector.load %arg5[%c0_16, %c0_17] : memref<8x128xf32, #tpu.memory_space<vmem>>, vector<8x128xf32>
    tpu.vector_store %arg5[%c0_16, %c0_17], %35 {strides = array<i32>} : memref<8x128xf32, #tpu.memory_space<vmem>>, vector<8x128xf32>,
    return
  }
  func.func @transform_0(%arg0: i32) -> (i32, i32) {
    %c0_i32 = arith.constant 0 : i32
    %c0_i32_0 = arith.constant 0 : i32
    return %arg0, %c0_i32 : i32, i32
  }
  func.func @transform_1(%arg0: i32) -> (i32, i32) {
    %c0_i32 = arith.constant 0 : i32
    %c0_i32_0 = arith.constant 0 : i32
    %c0_i32_1 = arith.constant 0 : i32
    return %c0_i32, %c0_i32_0 : i32, i32
  }
  func.func @transform_2(%arg0: i32) -> (i32, i32) {
    %c0_i32 = arith.constant 0 : i32
    %c0_i32_0 = arith.constant 0 : i32
    %c0_i32_1 = arith.constant 0 : i32
    return %c0_i32, %c0_i32_0 : i32, i32
  }
  func.func @transform_3(%arg0: i32) -> (i32, i32) {
    %c0_i32 = arith.constant 0 : i32
    %c0_i32_0 = arith.constant 0 : i32
    return %arg0, %c0_i32 : i32, i32
  }
  func.func @transform_4(%arg0: i32) -> (i32, i32) {
    %c0_i32 = arith.constant 0 : i32
    %c0_i32_0 = arith.constant 0 : i32
    return %arg0, %c0_i32 : i32, i32
  }
  func.func @transform_5(%arg0: i32) -> (i32, i32) {
    %c0_i32 = arith.constant 0 : i32
    %c0_i32_0 = arith.constant 0 : i32
    return %arg0, %c0_i32 : i32, i32
  }
}

</mosaic_0001>

<llo_original>
// kernel: tpu_custom_call.1
$region0: #{tpu_custom_call.1}
  #allocation0 [shape = 'u32[]', space=smem, size = 0x4, offset = 0x4, fixed_abs, tag = 'smem constant byte address 0x4 - core index']
  #allocation1 [shape = 'u32[144,128]{1,0:T(1,128)}', space=vmem, size = 0x12000, scoped, tag = 'internal scratch']
  %s0 = inlined_call_operand.hbm [shape: f32[16,32], index: 0, kind: input, shape index: {}]
  %s1 = inlined_call_operand.hbm [shape: f32[32,128], index: 1, kind: input, shape index: {}]
  %s2 = inlined_call_operand.vmem [shape: f32[1,128], index: 2, kind: input, shape index: {}]
  %s3 = inlined_call_operand.hbm [shape: f32[16,128], index: 3, kind: input, shape index: {}]
  %s4 = inlined_call_operand.hbm [shape: f32[16,128], index: 4, kind: output, shape index: {0}]
  %s5 = inlined_call_operand.hbm [shape: f32[16,128], index: 5, kind: output, shape index: {1}]
  %6 = xla_tuple %s4, %s5
  %s7 = sld [smem:[#allocation0]]
  $region69: #{tpu_custom_call.1} parent=0
    _
  %s9 = ssub.s32 1, %s7
  %s10 = scalar_select 0, %s9, %s7
  $region1: #{tpu_custom_call.1} parent=0
    #allocation2 [shape = 'u8[8192]{0}', space=vmem, size = 0x2000, scoped, tag = 'input window, operand 0']
    #allocation3 [shape = 's32[2]{0}', space=sflag, size = 0x8, scoped, tag = 'scoped memory for tpu_custom_call.1']
    #allocation4 [shape = 's32[2]{0}', space=sflag, size = 0x8, scoped, tag = 'scoped memory for tpu_custom_call.1']
    #allocation5 [shape = 'u8[16384]{0}', space=vmem, size = 0x4000, scoped, tag = 'input window, operand 1, single buffered']
    #allocation6 [shape = 's32[1]{0}', space=sflag, size = 0x4, scoped, tag = 'scoped memory for tpu_custom_call.1']
    #allocation7 [shape = 'u8[8192]{0}', space=vmem, size = 0x2000, scoped, tag = 'input window, operand 3']
    #allocation8 [shape = 'u8[8192]{0}', space=vmem, size = 0x2000, scoped, tag = 'output window, operand 0']
    #allocation9 [shape = 'u8[8192]{0}', space=vmem, size = 0x2000, scoped, tag = 'output window, operand 1']
    #allocation10 [shape = 's32[2]{0}', space=sflag, size = 0x8, scoped, tag = 'scoped memory for tpu_custom_call.1']
    %11 = vsyncpa [#allocation3], 0
    %s12 = scalar_lea.sflag [#allocation3], 1
    %13 = vsyncpa %s12, 0
    %14 = vsyncpa [#allocation6], 0
    %15 = vsyncpa [#allocation4], 0
    %s16 = scalar_lea.sflag [#allocation4], 1
    %17 = vsyncpa %s16, 0
    %18 = vsyncpa [#allocation10], 0
    %s19 = scalar_lea.sflag [#allocation10], 1
    %20 = vsyncpa %s19, 0
    loop: start=0, step=1, limit=4
    $region2: #{tpu_custom_call.1} parent=1 // loop_pre_header
      _
    $region3: #{tpu_custom_call.1} parent=1 // loop_header
      %s22 = sphi 0, %s26
      %p23 = scmp.ge.s32.totalorder %s22, 4
      %s32 = sphi 0, %s34
      %s35 = sphi 0, %s32
      %s36 = sphi 0, %s35
      %s52 = sphi 0, %s36
      %s56 = sphi 0, %s56
      %s58 = sphi 0, %s56
      %s59 = sphi 0, %s58
      %s73 = sphi 0, %s59
      %s77 = sphi 0, %s77
      %s79 = sphi 0, %s77
      %s80 = sphi 0, %s79
      %s94 = sphi 0, %s80
      %s100 = sphi 0, %s102
      %s103 = sphi 0, %s100
      %s104 = sphi 0, %s103
      %s120 = sphi 0, %s104
      %s126 = sphi 0, %s128
      %s129 = sphi 0, %s126
      %s130 = sphi 0, %s129
      %s146 = sphi 0, %s130
      %s152 = sphi 0, %s154
      %s155 = sphi 0, %s152
      %s156 = sphi 0, %s155
      %s172 = sphi 0, %s156
    $region4: #{tpu_custom_call.1} parent=1 // loop_header_branch
      %25 = sbr.rel (%p23) target = $region8
    $region5: #{tpu_custom_call.1} parent=1 // loop_body
      %s27 = ssub.s32 %s22, 1
      %s28 = ssub.s32 %s22, 2
      %s29 = sadd.s32 %s22, 1
      %s30 = ssub.s32 %s22, %s29
      %p31 = scmp.eq.s32.totalorder %s30, 0
      %s33 = sadd.s32 %s32, 1
      %s34 = scalar_select %p31, %s32, %s33
      %p37 = pneg %p31
      %p38 = scmp.eq.s32.totalorder %s22, 1
      %p39 = por %p37, %p38
      %p40 = scmp.ne.s32.totalorder %s32, %s35
      %p41 = scmp.eq.s32.totalorder %s22, 0
      %p42 = por %p40, %p41
      %p43 = scmp.ne.s32.totalorder %s32, %s35
      %p44 = scmp.eq.s32.totalorder %s27, 1
      %p45 = por %p43, %p44
      %p46 = scmp.ne.s32.totalorder %s35, %s36
      %p47 = scmp.eq.s32.totalorder %s27, 0
      %p48 = por %p46, %p47
      %p49 = scmp.ne.s32.totalorder %s35, %s36
      %p50 = scmp.eq.s32.totalorder %s28, 1
      %p51 = por %p49, %p50
      %p53 = scmp.ne.s32.totalorder %s36, %s52
      %p54 = scmp.eq.s32.totalorder %s28, 0
      %p55 = por %p53, %p54
      %s57 = sadd.s32 %s56, 1
      %p60 = scmp.eq.s32.totalorder %s22, 1
      %p61 = scmp.ne.s32.totalorder %s56, %s58
      %p62 = scmp.eq.s32.totalorder %s22, 0
      %p63 = por %p61, %p62
      %p64 = scmp.ne.s32.totalorder %s56, %s58
      %p65 = scmp.eq.s32.totalorder %s27, 1
      %p66 = por %p64, %p65
      %p67 = scmp.ne.s32.totalorder %s58, %s59
      %p68 = scmp.eq.s32.totalorder %s27, 0
      %p69 = por %p67, %p68
      %p70 = scmp.ne.s32.totalorder %s58, %s59
      %p71 = scmp.eq.s32.totalorder %s28, 1
      %p72 = por %p70, %p71
      %p74 = scmp.ne.s32.totalorder %s59, %s73
      %p75 = scmp.eq.s32.totalorder %s28, 0
      %p76 = por %p74, %p75
      %s78 = sadd.s32 %s77, 1
      %p81 = scmp.eq.s32.totalorder %s22, 1
      %p82 = scmp.ne.s32.totalorder %s77, %s79
      %p83 = scmp.eq.s32.totalorder %s22, 0
      %p84 = por %p82, %p83
      %p85 = scmp.ne.s32.totalorder %s77, %s79
      %p86 = scmp.eq.s32.totalorder %s27, 1
      %p87 = por %p85, %p86
      %p88 = scmp.ne.s32.totalorder %s79, %s80
      %p89 = scmp.eq.s32.totalorder %s27, 0
      %p90 = por %p88, %p89
      %p91 = scmp.ne.s32.totalorder %s79, %s80
      %p92 = scmp.eq.s32.totalorder %s28, 1
      %p93 = por %p91, %p92
      %p95 = scmp.ne.s32.totalorder %s80, %s94
      %p96 = scmp.eq.s32.totalorder %s28, 0
      %p97 = por %p95, %p96
      %s98 = ssub.s32 %s22, %s29
      %p99 = scmp.eq.s32.totalorder %s98, 0
      %s101 = sadd.s32 %s100, 1
      %s102 = scalar_select %p99, %s100, %s101
      %p105 = pneg %p99
      %p106 = scmp.eq.s32.totalorder %s22, 1
      %p107 = por %p105, %p106
      %p108 = scmp.ne.s32.totalorder %s100, %s103
      %p109 = scmp.eq.s32.totalorder %s22, 0
      %p110 = por %p108, %p109
      %p111 = scmp.ne.s32.totalorder %s100, %s103
      %p112 = scmp.eq.s32.totalorder %s27, 1
      %p113 = por %p111, %p112
      %p114 = scmp.ne.s32.totalorder %s103, %s104
      %p115 = scmp.eq.s32.totalorder %s27, 0
      %p116 = por %p114, %p115
      %p117 = scmp.ne.s32.totalorder %s103, %s104
      %p118 = scmp.eq.s32.totalorder %s28, 1
      %p119 = por %p117, %p118
      %p121 = scmp.ne.s32.totalorder %s104, %s120
      %p122 = scmp.eq.s32.totalorder %s28, 0
      %p123 = por %p121, %p122
      %s124 = ssub.s32 %s22, %s29
      %p125 = scmp.eq.s32.totalorder %s124, 0
      %s127 = sadd.s32 %s126, 1
      %s128 = scalar_select %p125, %s126, %s127
      %p131 = pneg %p125
      %p132 = scmp.eq.s32.totalorder %s22, 1
      %p133 = por %p131, %p132
      %p134 = scmp.ne.s32.totalorder %s126, %s129
      %p135 = scmp.eq.s32.totalorder %s22, 0
      %p136 = por %p134, %p135
      %p137 = scmp.ne.s32.totalorder %s126, %s129
      %p138 = scmp.eq.s32.totalorder %s27, 1
      %p139 = por %p137, %p138
      %p140 = scmp.ne.s32.totalorder %s129, %s130
      %p141 = scmp.eq.s32.totalorder %s27, 0
      %p142 = por %p140, %p141
      %p143 = scmp.ne.s32.totalorder %s129, %s130
      %p144 = scmp.eq.s32.totalorder %s28, 1
      %p145 = por %p143, %p144
      %p147 = scmp.ne.s32.totalorder %s130, %s146
      %p148 = scmp.eq.s32.totalorder %s28, 0
      %p149 = por %p147, %p148
      %s150 = ssub.s32 %s22, %s29
      %p151 = scmp.eq.s32.totalorder %s150, 0
      %s153 = sadd.s32 %s152, 1
      %s154 = scalar_select %p151, %s152, %s153
      %p157 = pneg %p151
      %p158 = scmp.eq.s32.totalorder %s22, 1
      %p159 = por %p157, %p158
      %p160 = scmp.ne.s32.totalorder %s152, %s155
      %p161 = scmp.eq.s32.totalorder %s22, 0
      %p162 = por %p160, %p161
      %p163 = scmp.ne.s32.totalorder %s152, %s155
      %p164 = scmp.eq.s32.totalorder %s27, 1
      %p165 = por %p163, %p164
      %p166 = scmp.ne.s32.totalorder %s155, %s156
      %p167 = scmp.eq.s32.totalorder %s27, 0
      %p168 = por %p166, %p167
      %p169 = scmp.ne.s32.totalorder %s155, %s156
      %p170 = scmp.eq.s32.totalorder %s28, 1
      %p171 = por %p169, %p170
      %p173 = scmp.ne.s32.totalorder %s156, %s172
      %p174 = scmp.eq.s32.totalorder %s28, 0
      %p175 = por %p173, %p174
      %p176 = scmp.le.s32.totalorder 1, %s22
      %p177 = scmp.lt.s32.totalorder %s22, 3
      %p178 = pnand %p176, %p177
      %p179 = pneg %p178
      // Predicated region
      $region9: #{tpu_custom_call.1} parent=5 // pred_check
        _
      $region10: #{tpu_custom_call.1} parent=5 // pred_check_branch
        %181 = sbr.rel (%p178) target = $region12
      $region11: #{tpu_custom_call.1} parent=5 // pred_region
        %s182 = ssub.s32 %s22, 1
        // Predicated region
        $region13: #{tpu_custom_call.1} parent=11 // pred_check
          %p183 = pneg %p69
        $region14: #{tpu_custom_call.1} parent=11 // pred_check_branch
          %185 = sbr.rel (%p183) target = $region16
        $region15: #{tpu_custom_call.1} parent=11 // pred_region
          %s187 = ssub.s32 512, 512
          %188 = vsyncadd [#allocation6], %s187
          %s189 = sshll.u32 [#allocation5], 4
          %s190 = int_to_ptr.vmem [resolvable:$true] %s189
          %195 = dma.hbm_to_vmem [thread:$0]  %s1, 512, %s190, [#allocation6], 128, 128, 8
        $region16: #{tpu_custom_call.1} parent=11 // pred_fallthru
          _
        // Predicated region
        $region17: #{tpu_custom_call.1} parent=11 // pred_check
          %p196 = pneg %p90
        $region18: #{tpu_custom_call.1} parent=11 // pred_check_branch
          %198 = sbr.rel (%p196) target = $region20
        $region19: #{tpu_custom_call.1} parent=11 // pred_region
          _
        $region20: #{tpu_custom_call.1} parent=11 // pred_fallthru
          _
      $region12: #{tpu_custom_call.1} parent=5 // pred_fallthru
        _
      %p199 = scmp.lt.s32.totalorder %s22, 2
      // Predicated region
      $region21: #{tpu_custom_call.1} parent=5 // pred_check
        %p200 = pneg %p199
      $region22: #{tpu_custom_call.1} parent=5 // pred_check_branch
        %202 = sbr.rel (%p200) target = $region24
      $region23: #{tpu_custom_call.1} parent=5 // pred_region
        // Predicated region
        $region25: #{tpu_custom_call.1} parent=23 // pred_check
          %p203 = pneg %p42
        $region26: #{tpu_custom_call.1} parent=23 // pred_check_branch
          %205 = sbr.rel (%p203) target = $region28
        $region27: #{tpu_custom_call.1} parent=23 // pred_region
          %s206 = sand.u32 %s22, 1
          %s207 = scalar_lea.sflag [#allocation3], %s206
          %s208 = sand.u32 %s32, 1
          %s209 = smul.addr %s208, 8
          %s210 = scalar_lea.vmem [#allocation2], %s209
          %s212 = ssub.s32 128, 128
          %213 = vsyncadd %s207, %s212
          %s214 = smul.addr %s22, 128
          %s215 = scalar_lea.hbm %s0, %s214
          %s217 = sshll.u32 %s210, 4
          %s218 = int_to_ptr.vmem [resolvable:$true] %s217
          %220 = dma.hbm_to_vmem [thread:$0]  %s215, 128, %s218, %s207
        $region28: #{tpu_custom_call.1} parent=23 // pred_fallthru
          _
        // Predicated region
        $region29: #{tpu_custom_call.1} parent=23 // pred_check
          %p221 = pneg %p110
        $region30: #{tpu_custom_call.1} parent=23 // pred_check_branch
          %223 = sbr.rel (%p221) target = $region32
        $region31: #{tpu_custom_call.1} parent=23 // pred_region
          %s224 = sand.u32 %s22, 1
          %s225 = scalar_lea.sflag [#allocation3], %s224
          %s226 = sand.u32 %s100, 1
          %s227 = smul.addr %s226, 8
          %s228 = scalar_lea.vmem [#allocation7], %s227
          %s230 = ssub.s32 128, 128
          %231 = vsyncadd %s225, %s230
          %s232 = smul.addr %s22, 128
          %s233 = scalar_lea.hbm %s3, %s232
          %s235 = sshll.u32 %s228, 4
          %s236 = int_to_ptr.vmem [resolvable:$true] %s235
          %238 = dma.hbm_to_vmem [thread:$0]  %s233, 128, %s236, %s225
        $region32: #{tpu_custom_call.1} parent=23 // pred_fallthru
          _
      $region24: #{tpu_custom_call.1} parent=5 // pred_fallthru
        _
      %p239 = scmp.le.s32.totalorder 1, %s22
      %p240 = scmp.lt.s32.totalorder %s22, 3
      %p241 = pnand %p239, %p240
      %p242 = pneg %p241
      // Predicated region
      $region33: #{tpu_custom_call.1} parent=5 // pred_check
        _
      $region34: #{tpu_custom_call.1} parent=5 // pred_check_branch
        %244 = sbr.rel (%p241) target = $region36
      $region35: #{tpu_custom_call.1} parent=5 // pred_region
        %s245 = ssub.s32 %s22, 1
        %s246 = sand.u32 %s27, 1
        %s247 = scalar_lea.sflag [#allocation3], %s246
        %s248 = sand.u32 %s35, 1
        %s249 = smul.addr %s248, 8
        %s250 = scalar_lea.vmem [#allocation2], %s249
        // Predicated region
        $region37: #{tpu_custom_call.1} parent=35 // pred_check
          %p251 = pneg %p48
        $region38: #{tpu_custom_call.1} parent=35 // pred_check_branch
          %253 = sbr.rel (%p251) target = $region40
        $region39: #{tpu_custom_call.1} parent=35 // pred_region
          %254 = dma.done %s247, 128
        $region40: #{tpu_custom_call.1} parent=35 // pred_fallthru
          _
        // Predicated region
        $region41: #{tpu_custom_call.1} parent=35 // pred_check
          %p255 = pneg %p69
        $region42: #{tpu_custom_call.1} parent=35 // pred_check_branch
          %257 = sbr.rel (%p255) target = $region44
        $region43: #{tpu_custom_call.1} parent=35 // pred_region
          %258 = dma.done [#allocation6], 512
        $region44: #{tpu_custom_call.1} parent=35 // pred_fallthru
          _
        %s259 = sand.u32 %s27, 1
        %s260 = scalar_lea.sflag [#allocation3], %s259
        %s261 = sand.u32 %s103, 1
        %s262 = smul.addr %s261, 8
        %s263 = scalar_lea.vmem [#allocation7], %s262
        // Predicated region
        $region45: #{tpu_custom_call.1} parent=35 // pred_check
          %p264 = pneg %p116
        $region46: #{tpu_custom_call.1} parent=35 // pred_check_branch
          %266 = sbr.rel (%p264) target = $region48
        $region47: #{tpu_custom_call.1} parent=35 // pred_region
          %267 = dma.done %s260, 128
        $region48: #{tpu_custom_call.1} parent=35 // pred_fallthru
          _
        %s268 = sand.u32 %s27, 1
        %s269 = scalar_lea.sflag [#allocation3], %s268
        %s270 = sand.u32 %s35, 1
        %s271 = smul.addr %s270, 8
        %s272 = scalar_lea.vmem [#allocation2], %s271
        %p273 = pneg %p48
        %p274 = pneg %p45
        %p275 = pneg %p69
        %p276 = pneg %p66
        %p277 = pneg %p90
        %p278 = pneg %p87
        %s279 = sand.u32 %s27, 1
        %s280 = scalar_lea.sflag [#allocation3], %s279
        %s281 = sand.u32 %s103, 1
        %s282 = smul.addr %s281, 8
        %s283 = scalar_lea.vmem [#allocation7], %s282
        %p284 = pneg %p116
        %p285 = pneg %p113
        %p286 = pneg %p142
        %p287 = pneg %p139
        %s288 = sand.u32 %s129, 1
        %s289 = scalar_lea.sflag [#allocation4], %s288
        %s290 = sand.u32 %s129, 1
        %s291 = smul.addr %s290, 8
        %s292 = scalar_lea.vmem [#allocation8], %s291
        %p293 = pneg %p168
        %p294 = pneg %p165
        %s295 = sand.u32 %s155, 1
        %s296 = scalar_lea.sflag [#allocation10], %s295
        %s297 = sand.u32 %s155, 1
        %s298 = smul.addr %s297, 8
        %s299 = scalar_lea.vmem [#allocation9], %s298
        %v300 = vld [vmem:[%s250] sm:$0xff]
        %v301 = vld [vmem:[#allocation5] sm:$0xff]
        %v302 = vld [vmem:[#allocation5 + $0x8] sm:$0xff]
        %v303 = vld [vmem:[#allocation5 + $0x10] sm:$0xff]
        %v304 = vld [vmem:[#allocation5 + $0x18] sm:$0xff]
        %v305 = vld [vmem:[%s2] sm:$0x1]
        %v307 = vlaneseq
        %v308 = vshrl.u32 %v307, 7
        %v309 = vsub.s32 0, %v308
        %v310 = vrot.slane %v305, %v309
        %vm312 = vcmask 261120
        %v314 = vsel %vm312, %v300, 0
        %316 = vmatprep.subr.mxu0 0.0
        %317 = vmatpush1.msra.mxu0 %v301
        %318 = vmatprep.subr.mxu0 0.0
        %319 = vmatpush1.msra.mxu0 %v302
        %320 = vmatprep.subr.mxu0 0.0
        %321 = vmatpush1.msra.mxu0 %v303
        %322 = vmatprep.subr.mxu0 0.0
        %323 = vmatpush1.msra.mxu0 %v304
        %324 = vmatprep.subr.mxu0 0.0
        %325 = vmatpush1.msra.mxu0 0.0
        %326 = vmatprep.subr.mxu0 0.0
        %327 = vmatpush1.msra.mxu0 0.0
        %328 = vmatprep.subr.mxu0 0.0
        %329 = vmatpush1.msra.mxu0 0.0
        %330 = vmatprep.subr.mxu0 0.0
        %331 = vmatpush1.msra.mxu0 0.0
        %332 = vmatprep.subr.mxu0 0.0
        %333 = vmatpush1.msra.mxu0 0.0
        %334 = vmatprep.subr.mxu0 0.0
        %335 = vmatpush1.msra.mxu0 0.0
        %336 = vmatprep.subr.mxu0 0.0
        %337 = vmatpush1.msra.mxu0 0.0
        %338 = vmatprep.subr.mxu0 0.0
        %339 = vmatpush1.msra.mxu0 0.0
        %340 = vmatprep.subr.mxu0 0.0
        %341 = vmatpush1.msra.mxu0 0.0
        %342 = vmatprep.subr.mxu0 0.0
        %343 = vmatpush1.msra.mxu0 0.0
        %344 = vmatprep.subr.mxu0 0.0
        %345 = vmatpush1.msra.mxu0 0.0
        %346 = vmatprep.subr.mxu0 0.0
        %347 = vmatpush1.msra.mxu0 0.0
        %348 = vmatprep.subr.mxu0 0.0
        %349 = vmatpush1.msra.mxu0 0.0
        %350 = vmatprep.subr.mxu0 0.0
        %351 = vmatpush1.msra.mxu0 0.0
        %352 = vmatprep.subr.mxu0 0.0
        %353 = vmatpush1.msra.mxu0 0.0
        %354 = vmatprep.subr.mxu0 0.0
        %355 = vmatpush1.msra.mxu0 0.0
        %356 = vmatprep.subr.mxu0 0.0
        %357 = vmatpush1.msra.mxu0 0.0
        %358 = vmatprep.subr.mxu0 0.0
        %359 = vmatpush1.msra.mxu0 0.0
        %360 = vmatprep.subr.mxu0 0.0
        %361 = vmatpush1.msra.mxu0 0.0
        %362 = vmatprep.subr.mxu0 0.0
        %363 = vmatpush1.msra.mxu0 0.0
        %364 = vmatprep.subr.mxu0 0.0
        %365 = vmatpush1.msra.mxu0 0.0
        %366 = vmatprep.subr.mxu0 0.0
        %367 = vmatpush1.msra.mxu0 0.0
        %368 = vmatprep.subr.mxu0 0.0
        %369 = vmatpush1.msra.mxu0 0.0
        %370 = vmatprep.subr.mxu0 0.0
        %371 = vmatpush1.msra.mxu0 0.0
        %372 = vmatprep.subr.mxu0 0.0
        %373 = vmatpush1.msra.mxu0 0.0
        %374 = vmatprep.subr.mxu0 0.0
        %375 = vmatpush1.msra.mxu0 0.0
        %376 = vmatprep.subr.mxu0 0.0
        %377 = vmatpush1.msra.mxu0 0.0
        %378 = vmatprep.subr.mxu0 0.0
        %379 = vmatpush1.msra.mxu0 0.0
        %380 = vmatprep.mubr.f32.mxu0 0.0
        %381 = vmatmul.mubr.f32.gmra.mrb[0].mxu0 %v314
        %v382 = vpop.f32.mrb[0].mxu0
        %v383 = vadd.f32 %v310, %v382
        %v384 = vpop.f32.mrb[0].mxu0
        %385 = vdwg.mxu0
        %386 = vmax.xlane.f32.xlu0 %v383
        %v387 = vpop.xlane.xlu0 %386
        %v388 = vsub.f32 %v383, %v387
        %v389 = vmul.f32 %v388, 1.442695
        %v390 = vpow.pop %v389
        %391 = vadd.xlane.f32.xlu0 %v390
        %v392 = vpop.xlane.xlu0 %391
        %v393 = vrcp.pop %v392
        %v394 = vmul.f32 %v390, %v393
        %395 = vst [vmem:[%s299] sm:$0xff] %v394
        %v396 = vlog2.pop %v392
        %v397 = vmul.f32 %v396, 0.6931472
        %v398 = vsub.f32 %v388, %v397
        %v399 = vld [vmem:[%s263] sm:$0xff]
        %v400 = vadd.f32 %v399, 1e-12
        %v401 = vlog2.pop %v400
        %v402 = vmul.f32 %v401, 0.6931472
        %v403 = vsub.f32 0.0, %v402
        %v404 = vadd.f32 %v403, 1e-12
        %v405 = vlog2.pop %v404
        %v406 = vmul.f32 %v405, 0.6931472
        %v407 = vsub.f32 0.0, %v406
        %v408 = vadd.f32 %v398, %v407
        %v409 = vmul.f32 %v408, 10.0
        %410 = vst [vmem:[%s292] sm:$0xff] %v409
        %s411 = sand.u32 %s129, 1
        %s412 = scalar_lea.sflag [#allocation4], %s411
        %s413 = sand.u32 %s129, 1
        %s414 = smul.addr %s413, 8
        %s415 = scalar_lea.vmem [#allocation8], %s414
        %s416 = sand.u32 %s155, 1
        %s417 = scalar_lea.sflag [#allocation10], %s416
        %s418 = sand.u32 %s155, 1
        %s419 = smul.addr %s418, 8
        %s420 = scalar_lea.vmem [#allocation9], %s419
        // Predicated region
        $region49: #{tpu_custom_call.1} parent=35 // pred_check
          %p421 = pneg %p139
        $region50: #{tpu_custom_call.1} parent=35 // pred_check_branch
          %423 = sbr.rel (%p421) target = $region52
        $region51: #{tpu_custom_call.1} parent=35 // pred_region
          %s425 = ssub.s32 128, 128
          %426 = vsyncadd %s412, %s425
          %s427 = smul.addr %s27, 128
          %s428 = scalar_lea.hbm %s4, %s427
          %s430 = sshll.u32 %s415, 4
          %s431 = int_to_ptr.vmem [resolvable:$true] %s430
          %433 = dma.vmem_to_hbm [thread:$0]  %s431, 128, %s428, %s412
        $region52: #{tpu_custom_call.1} parent=35 // pred_fallthru
          _
        // Predicated region
        $region53: #{tpu_custom_call.1} parent=35 // pred_check
          %p434 = pneg %p165
        $region54: #{tpu_custom_call.1} parent=35 // pred_check_branch
          %436 = sbr.rel (%p434) target = $region56
        $region55: #{tpu_custom_call.1} parent=35 // pred_region
          %s438 = ssub.s32 128, 128
          %439 = vsyncadd %s417, %s438
          %s440 = smul.addr %s27, 128
          %s441 = scalar_lea.hbm %s5, %s440
          %s443 = sshll.u32 %s420, 4
          %s444 = int_to_ptr.vmem [resolvable:$true] %s443
          %446 = dma.vmem_to_hbm [thread:$0]  %s444, 128, %s441, %s417
        $region56: #{tpu_custom_call.1} parent=35 // pred_fallthru
          _
      $region36: #{tpu_custom_call.1} parent=5 // pred_fallthru
        _
      %p447 = scmp.le.s32.totalorder 2, %s22
      // Predicated region
      $region57: #{tpu_custom_call.1} parent=5 // pred_check
        %p448 = pneg %p447
      $region58: #{tpu_custom_call.1} parent=5 // pred_check_branch
        %450 = sbr.rel (%p448) target = $region60
      $region59: #{tpu_custom_call.1} parent=5 // pred_region
        %s451 = ssub.s32 %s22, 2
        // Predicated region
        $region61: #{tpu_custom_call.1} parent=59 // pred_check
          %p452 = pneg %p145
        $region62: #{tpu_custom_call.1} parent=59 // pred_check_branch
          %454 = sbr.rel (%p452) target = $region64
        $region63: #{tpu_custom_call.1} parent=59 // pred_region
          %s455 = sand.u32 %s130, 1
          %s456 = scalar_lea.sflag [#allocation4], %s455
          %s457 = sand.u32 %s130, 1
          %s458 = smul.addr %s457, 8
          %s459 = scalar_lea.vmem [#allocation8], %s458
          %460 = dma.done %s456, 128
        $region64: #{tpu_custom_call.1} parent=59 // pred_fallthru
          _
        // Predicated region
        $region65: #{tpu_custom_call.1} parent=59 // pred_check
          %p461 = pneg %p171
        $region66: #{tpu_custom_call.1} parent=59 // pred_check_branch
          %463 = sbr.rel (%p461) target = $region68
        $region67: #{tpu_custom_call.1} parent=59 // pred_region
          %s464 = sand.u32 %s156, 1
          %s465 = scalar_lea.sflag [#allocation10], %s464
          %s466 = sand.u32 %s156, 1
          %s467 = smul.addr %s466, 8
          %s468 = scalar_lea.vmem [#allocation9], %s467
          %469 = dma.done %s465, 128
        $region68: #{tpu_custom_call.1} parent=59 // pred_fallthru
          _
      $region60: #{tpu_custom_call.1} parent=5 // pred_fallthru
        _
    $region6: #{tpu_custom_call.1} parent=1 // loop_footer
      %s26 = sadd.s32 1, %s22
    $region7: #{tpu_custom_call.1} parent=1 // loop_footer_branch
      %21 = sbr.rel target = $region3
    $region8: #{tpu_custom_call.1} parent=1 // loop_exit
      _
    %470 = vsyncpa [#allocation3], 1
    %s471 = scalar_lea.sflag [#allocation3], 1
    %472 = vsyncpa %s471, 1
    %473 = vsyncpa [#allocation6], 1
    %474 = vsyncpa [#allocation4], 1
    %s475 = scalar_lea.sflag [#allocation4], 1
    %476 = vsyncpa %s475, 1
    %477 = vsyncpa [#allocation10], 1
    %s478 = scalar_lea.sflag [#allocation10], 1
    %479 = vsyncpa %s478, 1

</llo_original>
